<compile_context>
chip_gen: v6e
topology: v6e:2x2x1
jax: 0.10.0
libtpu: 0.0.40
codegen_flags: <defaults>
</compile_context>

<pallas_src>
import jax
import jax.numpy as jnp
from jax.experimental import pallas as pl
from jax.experimental.pallas import tpu as pltpu

EPS = 1e-6


# ----------------------------------------------------------------------------
# helpers
# ----------------------------------------------------------------------------
def _pick_tile(dim, preferred, align):
    """Largest multiple of `align` <= preferred that divides `dim`, else the
    full dimension (Pallas allows full-extent blocks)."""
    cap = min(preferred, dim)
    t = (cap // align) * align
    while t >= align:
        if dim % t == 0:
            return t
        t -= align
    return dim


# ----------------------------------------------------------------------------
# Kernel A: fused linear head  ->  mean, sigma
# ----------------------------------------------------------------------------
def _make_head_kernel(K):
    def kernel(x_ref, w_ref, b_ref, mean_ref, sigma_ref, acc_ref):
        d = pl.program_id(1)

        @pl.when(d == 0)
        def _():
            acc_ref[...] = jnp.zeros_like(acc_ref)

        # bf16 inputs, f32 accumulation on the MXU
        acc_ref[...] += jnp.dot(x_ref[...], w_ref[...],
                                preferred_element_type=jnp.float32)

        @pl.when(d == pl.num_programs(1) - 1)
        def _():
            val = acc_ref[...] + b_ref[...]                 # (B_tile, 2K) f32
            mean_ref[...] = val[:, :K]
            sigma_ref[...] = jnp.maximum(jnp.exp(val[:, K:]), EPS)

    return kernel


def linear_head(x, w, b, K, *, b_tile_pref=256, d_tile_pref=512):
    """x: (B, D) f32, w: (D, 2K) f32, b: (2K,) f32 -> (mean, sigma) each (B, K)."""
    B, D = x.shape
    C2 = 2 * K
    assert w.shape == (D, C2) and b.shape == (C2,)

    bt = _pick_tile(B, b_tile_pref, 8)
    dt = _pick_tile(D, d_tile_pref, 128)

    x_bf = x.astype(jnp.bfloat16)
    w_bf = w.astype(jnp.bfloat16)
    b2 = b.astype(jnp.float32).reshape(1, C2)

    mean, sigma = pl.pallas_call(
        _make_head_kernel(K),
        out_shape=(jax.ShapeDtypeStruct((B, K), jnp.float32),
                   jax.ShapeDtypeStruct((B, K), jnp.float32)),
        grid_spec=pltpu.PrefetchScalarGridSpec(
            num_scalar_prefetch=0,
            grid=(B // bt, D // dt),
            in_specs=[
                pl.BlockSpec((bt, dt), lambda i, d: (i, d)),   # x tile
                pl.BlockSpec((dt, C2), lambda i, d: (d, 0)),   # weight tile
                pl.BlockSpec((1, C2), lambda i, d: (0, 0)),    # bias (resident)
            ],
            out_specs=[
                pl.BlockSpec((bt, K), lambda i, d: (i, 0)),
                pl.BlockSpec((bt, K), lambda i, d: (i, 0)),
            ],
            scratch_shapes=[pltpu.VMEM((bt, C2), jnp.float32)],
        ),
        compiler_params=pltpu.CompilerParams(
            dimension_semantics=("parallel", "arbitrary"),
            vmem_limit_bytes=32 * 1024 * 1024,
        ),
    )(x_bf, w_bf, b2)
    return mean, sigma


# ----------------------------------------------------------------------------
# Kernel B: reparameterized sampling (lane-dense output)
# ----------------------------------------------------------------------------
def _sample_kernel(mean_ref, sigma_ref, noise_ref, out_ref):
    out_ref[...] = mean_ref[...] + noise_ref[...] * sigma_ref[...]


def sample_outputs(mean, sigma, L, seed, *, l_tile_pref=256, bk_tile_pref=2048):
    """mean/sigma: (B, K) -> samples (L, B, K) with noise ~ N(0, 1)."""
    B, K = mean.shape
    BK = B * K
    mean_flat = mean.reshape(1, BK)      # glue reshape: lane-dense layout
    sigma_flat = sigma.reshape(1, BK)

    # torch.randn equivalent; generated deterministically from `seed`.
    noise = jax.random.normal(jax.random.PRNGKey(seed), (L, BK),
                              dtype=jnp.float32)

    lt = _pick_tile(L, l_tile_pref, 8)
    bkt = _pick_tile(BK, bk_tile_pref, 128)

    out_flat = pl.pallas_call(
        _sample_kernel,
        out_shape=jax.ShapeDtypeStruct((L, BK), jnp.float32),
        grid_spec=pltpu.PrefetchScalarGridSpec(
            num_scalar_prefetch=0,
            grid=(L // lt, BK // bkt),
            in_specs=[
                pl.BlockSpec((1, bkt), lambda li, bj: (0, bj)),    # mean
                pl.BlockSpec((1, bkt), lambda li, bj: (0, bj)),    # sigma
                pl.BlockSpec((lt, bkt), lambda li, bj: (li, bj)),  # noise
            ],
            out_specs=pl.BlockSpec((lt, bkt), lambda li, bj: (li, bj)),
        ),
        compiler_params=pltpu.CompilerParams(
            dimension_semantics=("parallel", "parallel"),
            vmem_limit_bytes=32 * 1024 * 1024,
        ),
    )(mean_flat, sigma_flat, noise)
    return out_flat.reshape(L, B, K)


# ----------------------------------------------------------------------------
# Module-level forward + reg
# ----------------------------------------------------------------------------
def compute_reg_l2(params):
    # reg == 'l2': sum of squares of all parameters (plain-JAX glue reduction).
    return sum(jnp.sum(p.astype(jnp.float32) ** 2) for p in params)


def vifo_single_exp_forward(L, x_nchw, w, b, num_classes, seed, reg=False):
    """Equivalent of VIFOSingleExp.forward(L, x).

    x_nchw : (B, C, H, W) f32, w: (D, 2K) f32, b: (2K,) f32.
    Returns (L, B, K) f32 samples (and the 'l2' reg term if reg=True).
    """
    B = x_nchw.shape[0]
    x = x_nchw.reshape(B, -1)                        # NCHW -> (B, D) row-major
    mean, sigma = linear_head(x, w, b, num_classes)
    out = sample_outputs(mean, sigma, L, seed)
    if not reg:
        return out
    # TODO(synk): only the 'l2' parameter-norm regularizer is reproduced; the
    # KL/prior-var variants from VIFOBase.compute_reg are not implemented here.
    return out, compute_reg_l2([w, b])


# ----------------------------------------------------------------------------
# self-test
# ----------------------------------------------------------------------------
if __name__ == "__main__":
    B, C, H, Wd = 2, 4, 16, 16
    num_classes = 4
    L = 8
    D = C * H * Wd

    key = jax.random.PRNGKey(0)
    kx, kw, kb = jax.random.split(key, 3)

    x = jax.random.normal(kx, (B, C, H, Wd), dtype=jnp.float32)
    w = 0.02 * jax.random.normal(kw, (D, 2 * num_classes), dtype=jnp.float32)
    b = 0.01 * jax.random.normal(kb, (2 * num_classes,), dtype=jnp.float32)

    out = vifo_single_exp_forward(L, x, w, b, num_classes, seed=1234)
    out = jax.block_until_ready(out)
    assert out.shape == (L, B, num_classes)

    # --- check the linear head (mean / sigma) against a pure-JAX reference ---
    mean_k, sigma_k = linear_head(x.reshape(B, -1), w, b, num_classes)
    mean_k, sigma_k = jax.block_until_ready((mean_k, sigma_k))
    xb = x.reshape(B, -1).astype(jnp.bfloat16).astype(jnp.float32)
    wb = w.astype(jnp.bfloat16).astype(jnp.float32)
    val = xb @ wb + b
    mean_ref = val[:, :num_classes]
    sigma_ref = jnp.maximum(jnp.exp(val[:, num_classes:]), EPS)
    assert jnp.allclose(mean_k, mean_ref, atol=2e-3, rtol=2e-3)
    assert jnp.allclose(sigma_k, sigma_ref, atol=2e-3, rtol=2e-3)

    # --- check the sampler: implied noise ~ N(0,1), finite, deterministic ----
    noise = (out - mean_ref[None]) / sigma_ref[None]
    assert bool(jnp.all(jnp.isfinite(noise)))
    assert abs(float(noise.mean())) < 0.6          # 64 samples -> wide margin
    assert 0.5 < float(noise.std()) < 1.5
    out2 = vifo_single_exp_forward(L, x, w, b, num_classes, seed=1234)
    assert jnp.array_equal(out, jax.block_until_ready(out2))       # same seed
    out3 = vifo_single_exp_forward(L, x, w, b, num_classes, seed=4321)
    assert not jnp.array_equal(out, jax.block_until_ready(out3))   # new seed

    # --- 'l2' regularizer helper --------------------------------------------
    _ = jax.block_until_ready(compute_reg_l2([w, b]))

    print("KERNEL_OK")
</pallas_src>

<mosaic_0001>
module attributes {stable_mosaic.version = 11 : i64} {
  func.func @kernel(%arg0: i32, %arg1: i32, %arg2: memref<2x512xbf16, #tpu.memory_space<vmem>>, %arg3: memref<512x8xbf16, #tpu.memory_space<vmem>>, %arg4: memref<1x8xf32, #tpu.memory_space<vmem>>, %arg5: memref<2x4xf32, #tpu.memory_space<vmem>>, %arg6: memref<2x4xf32, #tpu.memory_space<vmem>>, %arg7: memref<2x8xf32, #tpu.memory_space<vmem>>) attributes {dimension_semantics = [#tpu.dimension_semantics<parallel>, #tpu.dimension_semantics<arbitrary>], iteration_bounds = array<i64: 1, 2>, scalar_prefetch = 0 : i64, scratch_operands = 1 : i64, tpu.core_type = #tpu.core_type<tc>, window_params = [{transform_indices = @transform_0, window_bounds = array<i64: 2, 512>}, {transform_indices = @transform_1, window_bounds = array<i64: 512, 8>}, {pipeline_mode = #tpu.pipeline_mode<synchronous>, transform_indices = @transform_2, window_bounds = array<i64: 1, 8>}, {transform_indices = @transform_3, window_bounds = array<i64: 2, 4>}, {transform_indices = @transform_4, window_bounds = array<i64: 2, 4>}]} {
    %c0_i32 = arith.constant 0 : i32
    %0 = arith.cmpi eq, %arg1, %c0_i32 : i32
    %1 = arith.extui %0 : i1 to i32
    %c0_i32_0 = arith.constant 0 : i32
    %2 = arith.cmpi ne, %1, %c0_i32_0 : i32
    scf.if %2 {
      %cst_9 = arith.constant 0.000000e+00 : f32
      %12 = vector.broadcast %cst_9 : f32 to vector<2x8xf32>
      %c0_10 = arith.constant 0 : index
      %c0_11 = arith.constant 0 : index
      %13 = vector.load %arg7[%c0_10, %c0_11] : memref<2x8xf32, #tpu.memory_space<vmem>>, vector<2x8xf32>
      tpu.vector_store %arg7[%c0_10, %c0_11], %12 {strides = array<i32>} : memref<2x8xf32, #tpu.memory_space<vmem>>, vector<2x8xf32>,
    } else {
    }
    %c0 = arith.constant 0 : index
    %c0_1 = arith.constant 0 : index
    %3 = vector.load %arg7[%c0, %c0_1] : memref<2x8xf32, #tpu.memory_space<vmem>>, vector<2x8xf32>
    %c0_2 = arith.constant 0 : index
    %c0_3 = arith.constant 0 : index
    %4 = vector.load %arg2[%c0_2, %c0_3] : memref<2x512xbf16, #tpu.memory_space<vmem>>, vector<2x512xbf16>
    %c0_4 = arith.constant 0 : index
    %c0_5 = arith.constant 0 : index
    %5 = vector.load %arg3[%c0_4, %c0_5] : memref<512x8xbf16, #tpu.memory_space<vmem>>, vector<512x8xbf16>
    %cst = arith.constant dense<0.000000e+00> : vector<2x8xf32>
    %6 = tpu.matmul %4, %5, %cst {dimension_numbers = #tpu.dot_dimension_numbers<[1], [0], [0], [1], [0, 0, 1, 1], [], []>} : vector<2x512xbf16>, vector<512x8xbf16>, vector<2x8xf32> -> vector<2x8xf32>
    %7 = arith.addf %3, %6 : vector<2x8xf32>
    %c0_6 = arith.constant 0 : index
    %c0_7 = arith.constant 0 : index
    %8 = vector.load %arg7[%c0_6, %c0_7] : memref<2x8xf32, #tpu.memory_space<vmem>>, vector<2x8xf32>
    tpu.vector_store %arg7[%c0_6, %c0_7], %7 {strides = array<i32>} : memref<2x8xf32, #tpu.memory_space<vmem>>, vector<2x8xf32>,
    %c1_i32 = arith.constant 1 : i32
    %9 = arith.cmpi eq, %arg1, %c1_i32 : i32
    %10 = arith.extui %9 : i1 to i32
    %c0_i32_8 = arith.constant 0 : i32
    %11 = arith.cmpi ne, %10, %c0_i32_8 : i32
    scf.if %11 {
      %c0_9 = arith.constant 0 : index
      %c0_10 = arith.constant 0 : index
      %12 = vector.load %arg7[%c0_9, %c0_10] : memref<2x8xf32, #tpu.memory_space<vmem>>, vector<2x8xf32>
      %c0_11 = arith.constant 0 : index
      %c0_12 = arith.constant 0 : index
      %13 = vector.load %arg4[%c0_11, %c0_12] : memref<1x8xf32, #tpu.memory_space<vmem>>, vector<1x8xf32>
      %14 = vector.broadcast %13 : vector<1x8xf32> to vector<2x8xf32>
      %15 = arith.addf %12, %14 : vector<2x8xf32>
      %16 = vector.extract_strided_slice %15 {offsets = [0, 0], sizes = [2, 4], strides = [1, 1]} : vector<2x8xf32> to vector<2x4xf32>
      %c0_13 = arith.constant 0 : index
      %c0_14 = arith.constant 0 : index
      %17 = vector.load %arg5[%c0_13, %c0_14] : memref<2x4xf32, #tpu.memory_space<vmem>>, vector<2x4xf32>
      tpu.vector_store %arg5[%c0_13, %c0_14], %16 {strides = array<i32>} : memref<2x4xf32, #tpu.memory_space<vmem>>, vector<2x4xf32>,
      %18 = vector.extract_strided_slice %15 {offsets = [0, 4], sizes = [2, 4], strides = [1, 1]} : vector<2x8xf32> to vector<2x4xf32>
      %19 = math.exp %18 : vector<2x4xf32>
      %cst_15 = arith.constant 9.99999997E-7 : f32
      %20 = vector.broadcast %cst_15 : f32 to vector<2x4xf32>
      %21 = arith.maximumf %19, %20 : vector<2x4xf32>
      %c0_16 = arith.constant 0 : index
      %c0_17 = arith.constant 0 : index
      %22 = vector.load %arg6[%c0_16, %c0_17] : memref<2x4xf32, #tpu.memory_space<vmem>>, vector<2x4xf32>
      tpu.vector_store %arg6[%c0_16, %c0_17], %21 {strides = array<i32>} : memref<2x4xf32, #tpu.memory_space<vmem>>, vector<2x4xf32>,
    } else {
    }
    return
  }
  func.func @transform_0(%arg0: i32, %arg1: i32) -> (i32, i32) {
    %c0_i32 = arith.constant 0 : i32
    return %arg0, %arg1 : i32, i32
  }
  func.func @transform_1(%arg0: i32, %arg1: i32) -> (i32, i32) {
    %c0_i32 = arith.constant 0 : i32
    %c0_i32_0 = arith.constant 0 : i32
    return %arg1, %c0_i32 : i32, i32
  }
  func.func @transform_2(%arg0: i32, %arg1: i32) -> (i32, i32) {
    %c0_i32 = arith.constant 0 : i32
    %c0_i32_0 = arith.constant 0 : i32
    %c0_i32_1 = arith.constant 0 : i32
    return %c0_i32, %c0_i32_0 : i32, i32
  }
  func.func @transform_3(%arg0: i32, %arg1: i32) -> (i32, i32) {
    %c0_i32 = arith.constant 0 : i32
    %c0_i32_0 = arith.constant 0 : i32
    return %arg0, %c0_i32 : i32, i32
  }
  func.func @transform_4(%arg0: i32, %arg1: i32) -> (i32, i32) {
    %c0_i32 = arith.constant 0 : i32
    %c0_i32_0 = arith.constant 0 : i32
    return %arg0, %c0_i32 : i32, i32
  }
}

</mosaic_0001>

<llo_original>
// kernel: tpu_custom_call.1
$region0: #{tpu_custom_call.1}
  #allocation0 [shape = 'u32[]', space=smem, size = 0x4, offset = 0x4, fixed_abs, tag = 'smem constant byte address 0x4 - core index']
  #allocation1 [shape = 'u32[144,128]{1,0:T(1,128)}', space=vmem, size = 0x12000, scoped, tag = 'internal scratch']
  #allocation2 [shape = 'f32[2,8]{1,0:T(2,128)}', space=vmem, size = 0x400, scoped, tag = 'scratch operand']
  %s0 = inlined_call_operand.vmem [shape: bf16[2,1024], index: 0, kind: input, shape index: {}]
  %s1 = inlined_call_operand.vmem [shape: bf16[1024,8], index: 1, kind: input, shape index: {}]
  %s2 = inlined_call_operand.vmem [shape: f32[1,8], index: 2, kind: input, shape index: {}]
  %s3 = inlined_call_operand.hbm [shape: f32[2,4], index: 3, kind: output, shape index: {0}]
  %s4 = inlined_call_operand.hbm [shape: f32[2,4], index: 4, kind: output, shape index: {1}]
  %5 = xla_tuple %s3, %s4
  %s6 = sld [smem:[#allocation0]]
  $region61: #{tpu_custom_call.1} parent=0
    _
  %s8 = ssub.s32 1, %s6
  %s9 = scalar_select 0, %s8, %s6
  $region1: #{tpu_custom_call.1} parent=0
    #allocation3 [shape = 'u8[1024]{0}', space=vmem, size = 0x400, scoped, tag = 'output window, operand 0, single buffered']
    #allocation4 [shape = 's32[2]{0}', space=sflag, size = 0x8, scoped, tag = 'scoped memory for tpu_custom_call.1']
    #allocation5 [shape = 'u8[1024]{0}', space=vmem, size = 0x400, scoped, tag = 'output window, operand 1, single buffered']
    #allocation6 [shape = 's32[1]{0}', space=sflag, size = 0x4, scoped, tag = 'scoped memory for tpu_custom_call.1']
    %10 = vsyncpa [#allocation4], 0
    %11 = vsyncpa [#allocation6], 0
    loop: start=0, step=1, limit=4
    $region2: #{tpu_custom_call.1} parent=1 // loop_pre_header
      _
    $region3: #{tpu_custom_call.1} parent=1 // loop_header
      %s13 = sphi 0, %s17
      %p14 = scmp.ge.s32.totalorder %s13, 4
      %s20 = sphi 0, %s32
      %s21 = sphi 0, %s28
      %s22 = sphi 0, %s20
      %s23 = sphi 0, %s21
      %s24 = sphi 0, %s22
      %s25 = sphi 0, %s23
      %s37 = sphi 0, %s39
      %s40 = sphi 0, %s37
      %s41 = sphi 0, %s40
      %s57 = sphi 0, %s41
      %s63 = sphi 0, %s65
      %s66 = sphi 0, %s63
      %s67 = sphi 0, %s66
      %s83 = sphi 0, %s67
      %s87 = sphi 0, %s87
      %s89 = sphi 0, %s87
      %s90 = sphi 0, %s89
      %s104 = sphi 0, %s90
      %s110 = sphi 0, %s112
      %s113 = sphi 0, %s110
      %s114 = sphi 0, %s113
      %s130 = sphi 0, %s114
      %s136 = sphi 0, %s138
      %s139 = sphi 0, %s136
      %s140 = sphi 0, %s139
      %s156 = sphi 0, %s140
    $region4: #{tpu_custom_call.1} parent=1 // loop_header_branch
      %16 = sbr.rel (%p14) target = $region8
    $region5: #{tpu_custom_call.1} parent=1 // loop_body
      %s18 = ssub.s32 %s13, 1
      %s19 = ssub.s32 %s13, 2
      %s26 = sadd.s32 1, %s21
      %p27 = scmp.ge.s32.totalorder %s26, 2
      %s28 = scalar_select %p27, 0, %s26
      %s29 = sadd.s32 1, %s20
      %s30 = scalar_select %p27, %s29, %s20
      %p31 = scmp.ge.s32.totalorder %s30, 1
      %s32 = scalar_select %p31, 0, %s30
      %s33 = ssub.s32 %s20, %s32
      %s34 = ssub.s32 %s21, %s28
      %s35 = sor.u32 %s33, %s34
      %p36 = scmp.eq.s32.totalorder %s35, 0
      %s38 = sadd.s32 %s37, 1
      %s39 = scalar_select %p36, %s37, %s38
      %p42 = pneg %p36
      %p43 = scmp.eq.s32.totalorder %s13, 1
      %p44 = por %p42, %p43
      %p45 = scmp.ne.s32.totalorder %s37, %s40
      %p46 = scmp.eq.s32.totalorder %s13, 0
      %p47 = por %p45, %p46
      %p48 = scmp.ne.s32.totalorder %s37, %s40
      %p49 = scmp.eq.s32.totalorder %s18, 1
      %p50 = por %p48, %p49
      %p51 = scmp.ne.s32.totalorder %s40, %s41
      %p52 = scmp.eq.s32.totalorder %s18, 0
      %p53 = por %p51, %p52
      %p54 = scmp.ne.s32.totalorder %s40, %s41
      %p55 = scmp.eq.s32.totalorder %s19, 1
      %p56 = por %p54, %p55
      %p58 = scmp.ne.s32.totalorder %s41, %s57
      %p59 = scmp.eq.s32.totalorder %s19, 0
      %p60 = por %p58, %p59
      %s61 = ssub.s32 %s21, %s28
      %p62 = scmp.eq.s32.totalorder %s61, 0
      %s64 = sadd.s32 %s63, 1
      %s65 = scalar_select %p62, %s63, %s64
      %p68 = pneg %p62
      %p69 = scmp.eq.s32.totalorder %s13, 1
      %p70 = por %p68, %p69
      %p71 = scmp.ne.s32.totalorder %s63, %s66
      %p72 = scmp.eq.s32.totalorder %s13, 0
      %p73 = por %p71, %p72
      %p74 = scmp.ne.s32.totalorder %s63, %s66
      %p75 = scmp.eq.s32.totalorder %s18, 1
      %p76 = por %p74, %p75
      %p77 = scmp.ne.s32.totalorder %s66, %s67
      %p78 = scmp.eq.s32.totalorder %s18, 0
      %p79 = por %p77, %p78
      %p80 = scmp.ne.s32.totalorder %s66, %s67
      %p81 = scmp.eq.s32.totalorder %s19, 1
      %p82 = por %p80, %p81
      %p84 = scmp.ne.s32.totalorder %s67, %s83
      %p85 = scmp.eq.s32.totalorder %s19, 0
      %p86 = por %p84, %p85
      %s88 = sadd.s32 %s87, 1
      %p91 = scmp.eq.s32.totalorder %s13, 1
      %p92 = scmp.ne.s32.totalorder %s87, %s89
      %p93 = scmp.eq.s32.totalorder %s13, 0
      %p94 = por %p92, %p93
      %p95 = scmp.ne.s32.totalorder %s87, %s89
      %p96 = scmp.eq.s32.totalorder %s18, 1
      %p97 = por %p95, %p96
      %p98 = scmp.ne.s32.totalorder %s89, %s90
      %p99 = scmp.eq.s32.totalorder %s18, 0
      %p100 = por %p98, %p99
      %p101 = scmp.ne.s32.totalorder %s89, %s90
      %p102 = scmp.eq.s32.totalorder %s19, 1
      %p103 = por %p101, %p102
      %p105 = scmp.ne.s32.totalorder %s90, %s104
      %p106 = scmp.eq.s32.totalorder %s19, 0
      %p107 = por %p105, %p106
      %s108 = ssub.s32 %s20, %s32
      %p109 = scmp.eq.s32.totalorder %s108, 0
      %s111 = sadd.s32 %s110, 1
      %s112 = scalar_select %p109, %s110, %s111
      %p115 = pneg %p109
      %p116 = scmp.eq.s32.totalorder %s13, 1
      %p117 = por %p115, %p116
      %p118 = scmp.ne.s32.totalorder %s110, %s113
      %p119 = scmp.eq.s32.totalorder %s13, 0
      %p120 = por %p118, %p119
      %p121 = scmp.ne.s32.totalorder %s110, %s113
      %p122 = scmp.eq.s32.totalorder %s18, 1
      %p123 = por %p121, %p122
      %p124 = scmp.ne.s32.totalorder %s113, %s114
      %p125 = scmp.eq.s32.totalorder %s18, 0
      %p126 = por %p124, %p125
      %p127 = scmp.ne.s32.totalorder %s113, %s114
      %p128 = scmp.eq.s32.totalorder %s19, 1
      %p129 = por %p127, %p128
      %p131 = scmp.ne.s32.totalorder %s114, %s130
      %p132 = scmp.eq.s32.totalorder %s19, 0
      %p133 = por %p131, %p132
      %s134 = ssub.s32 %s20, %s32
      %p135 = scmp.eq.s32.totalorder %s134, 0
      %s137 = sadd.s32 %s136, 1
      %s138 = scalar_select %p135, %s136, %s137
      %p141 = pneg %p135
      %p142 = scmp.eq.s32.totalorder %s13, 1
      %p143 = por %p141, %p142
      %p144 = scmp.ne.s32.totalorder %s136, %s139
      %p145 = scmp.eq.s32.totalorder %s13, 0
      %p146 = por %p144, %p145
      %p147 = scmp.ne.s32.totalorder %s136, %s139
      %p148 = scmp.eq.s32.totalorder %s18, 1
      %p149 = por %p147, %p148
      %p150 = scmp.ne.s32.totalorder %s139, %s140
      %p151 = scmp.eq.s32.totalorder %s18, 0
      %p152 = por %p150, %p151
      %p153 = scmp.ne.s32.totalorder %s139, %s140
      %p154 = scmp.eq.s32.totalorder %s19, 1
      %p155 = por %p153, %p154
      %p157 = scmp.ne.s32.totalorder %s140, %s156
      %p158 = scmp.eq.s32.totalorder %s19, 0
      %p159 = por %p157, %p158
      %p160 = scmp.le.s32.totalorder 1, %s13
      %p161 = scmp.lt.s32.totalorder %s13, 3
      %p162 = pnand %p160, %p161
      %p163 = pneg %p162
      // Predicated region
      $region9: #{tpu_custom_call.1} parent=5 // pred_check
        _
      $region10: #{tpu_custom_call.1} parent=5 // pred_check_branch
        %165 = sbr.rel (%p162) target = $region12
      $region11: #{tpu_custom_call.1} parent=5 // pred_region
        %s166 = ssub.s32 %s13, 1
        // Predicated region
        $region13: #{tpu_custom_call.1} parent=11 // pred_check
          %p167 = pneg %p100
        $region14: #{tpu_custom_call.1} parent=11 // pred_check_branch
          %169 = sbr.rel (%p167) target = $region16
        $region15: #{tpu_custom_call.1} parent=11 // pred_region
          _
        $region16: #{tpu_custom_call.1} parent=11 // pred_fallthru
          _
      $region12: #{tpu_custom_call.1} parent=5 // pred_fallthru
        _
      %p170 = scmp.lt.s32.totalorder %s13, 2
      // Predicated region
      $region17: #{tpu_custom_call.1} parent=5 // pred_check
        %p171 = pneg %p170
      $region18: #{tpu_custom_call.1} parent=5 // pred_check_branch
        %173 = sbr.rel (%p171) target = $region20
      $region19: #{tpu_custom_call.1} parent=5 // pred_region
        // Predicated region
        $region21: #{tpu_custom_call.1} parent=19 // pred_check
          %p174 = pneg %p47
        $region22: #{tpu_custom_call.1} parent=19 // pred_check_branch
          %176 = sbr.rel (%p174) target = $region24
        $region23: #{tpu_custom_call.1} parent=19 // pred_region
          %s177 = smul.u32 4, %s21
          %p178 = scmp.lt.s32.totalorder %s20, 0
          %s179 = scalar_select %p178, %s20, 0
          %p180 = scmp.lt.s32.totalorder %s177, 7
          %s181 = scalar_select %p180, %s177, 7
          %s182 = smul.addr %s179, 8
          %s183 = sadd.s32 %s181, %s182
          %s184 = scalar_lea.vmem %s0, %s183
          %s185 = smul.u32 4, %s21
        $region24: #{tpu_custom_call.1} parent=19 // pred_fallthru
          _
        // Predicated region
        $region25: #{tpu_custom_call.1} parent=19 // pred_check
          %p186 = pneg %p73
        $region26: #{tpu_custom_call.1} parent=19 // pred_check_branch
          %188 = sbr.rel (%p186) target = $region28
        $region27: #{tpu_custom_call.1} parent=19 // pred_region
          %s189 = smul.u32 64, %s21
          %p190 = scmp.lt.s32.totalorder %s189, 127
          %s191 = scalar_select %p190, %s189, 127
          %s192 = smul.addr %s191, 4
          %s193 = scalar_lea.vmem %s1, %s192
          %s194 = smul.u32 64, %s21
        $region28: #{tpu_custom_call.1} parent=19 // pred_fallthru
          _
      $region20: #{tpu_custom_call.1} parent=5 // pred_fallthru
        _
      %p195 = scmp.le.s32.totalorder 1, %s13
      %p196 = scmp.lt.s32.totalorder %s13, 3
      %p197 = pnand %p195, %p196
      %p198 = pneg %p197
      // Predicated region
      $region29: #{tpu_custom_call.1} parent=5 // pred_check
        _
      $region30: #{tpu_custom_call.1} parent=5 // pred_check_branch
        %200 = sbr.rel (%p197) target = $region32
      $region31: #{tpu_custom_call.1} parent=5 // pred_region
        %s201 = ssub.s32 %s13, 1
        %s202 = smul.u32 4, %s23
        %p203 = scmp.lt.s32.totalorder %s22, 0
        %s204 = scalar_select %p203, %s22, 0
        %p205 = scmp.lt.s32.totalorder %s202, 7
        %s206 = scalar_select %p205, %s202, 7
        %s207 = smul.addr %s204, 8
        %s208 = sadd.s32 %s206, %s207
        %s209 = scalar_lea.vmem %s0, %s208
        %p210 = pneg %p53
        %p211 = pneg %p50
        %s212 = smul.u32 64, %s23
        %p213 = scmp.lt.s32.totalorder %s212, 127
        %s214 = scalar_select %p213, %s212, 127
        %s215 = smul.addr %s214, 4
        %s216 = scalar_lea.vmem %s1, %s215
        %p217 = pneg %p79
        %p218 = pneg %p76
        %p219 = pneg %p100
        %p220 = pneg %p97
        %p221 = pneg %p126
        %p222 = pneg %p123
        %p223 = pneg %p152
        %p224 = pneg %p149
        %s225 = smul.u32 4, %s23
        %p226 = scmp.lt.s32.totalorder %s22, 0
        %s227 = scalar_select %p226, %s22, 0
        %p228 = scmp.lt.s32.totalorder %s225, 7
        %s229 = scalar_select %p228, %s225, 7
        %s230 = smul.addr %s227, 8
        %s231 = sadd.s32 %s229, %s230
        %s232 = scalar_lea.vmem %s0, %s231
        %s233 = smul.u32 4, %s23
        %s234 = smul.u32 64, %s23
        %p235 = scmp.lt.s32.totalorder %s234, 127
        %s236 = scalar_select %p235, %s234, 127
        %s237 = smul.addr %s236, 4
        %s238 = scalar_lea.vmem %s1, %s237
        %s239 = smul.u32 64, %s23
        %p241 = scmp.eq.s32.totalorder %s23, 0
        // Predicated region
        $region33: #{tpu_custom_call.1} parent=31 // pred_check
          %p242 = pneg %p241
        $region34: #{tpu_custom_call.1} parent=31 // pred_check_branch
          %244 = sbr.rel (%p242) target = $region36
        $region35: #{tpu_custom_call.1} parent=31 // pred_region
          %vm245 = vcmask 58368
          %246 = vst.msk [vmem:[#allocation2] sm:$0x3] %vm245, 0.0
        $region36: #{tpu_custom_call.1} parent=31 // pred_fallthru
          _
        %v247 = vld [vmem:[#allocation2] sm:$0x3]
        %v248 = vld [vmem:[%s232] sm:$0xf]
        %v249 = vld [vmem:[%s238] sm:$0xf]
        %v250 = vld [vmem:[%s238 + $0x4] sm:$0xf]
        %v251 = vld [vmem:[%s238 + $0x8] sm:$0xf]
        %v252 = vld [vmem:[%s238 + $0xc] sm:$0xf]
        %v253 = vld [vmem:[%s238 + $0x10] sm:$0xf]
        %v254 = vld [vmem:[%s238 + $0x14] sm:$0xf]
        %v255 = vld [vmem:[%s238 + $0x18] sm:$0xf]
        %v256 = vld [vmem:[%s238 + $0x1c] sm:$0xf]
        %v257 = vld [vmem:[%s238 + $0x20] sm:$0xf]
        %v258 = vld [vmem:[%s238 + $0x24] sm:$0xf]
        %v259 = vld [vmem:[%s238 + $0x28] sm:$0xf]
        %v260 = vld [vmem:[%s238 + $0x2c] sm:$0xf]
        %v261 = vld [vmem:[%s238 + $0x30] sm:$0xf]
        %v262 = vld [vmem:[%s238 + $0x34] sm:$0xf]
        %v263 = vld [vmem:[%s238 + $0x38] sm:$0xf]
        %v264 = vld [vmem:[%s238 + $0x3c] sm:$0xf]
        %v265 = vld [vmem:[%s238 + $0x40] sm:$0xf]
        %v266 = vld [vmem:[%s238 + $0x44] sm:$0xf]
        %v267 = vld [vmem:[%s238 + $0x48] sm:$0xf]
        %v268 = vld [vmem:[%s238 + $0x4c] sm:$0xf]
        %v269 = vld [vmem:[%s238 + $0x50] sm:$0xf]
        %v270 = vld [vmem:[%s238 + $0x54] sm:$0xf]
        %v271 = vld [vmem:[%s238 + $0x58] sm:$0xf]
        %v272 = vld [vmem:[%s238 + $0x5c] sm:$0xf]
        %v273 = vld [vmem:[%s238 + $0x60] sm:$0xf]
        %v274 = vld [vmem:[%s238 + $0x64] sm:$0xf]
        %v275 = vld [vmem:[%s238 + $0x68] sm:$0xf]
        %v276 = vld [vmem:[%s238 + $0x6c] sm:$0xf]
        %v277 = vld [vmem:[%s238 + $0x70] sm:$0xf]
        %v278 = vld [vmem:[%s238 + $0x74] sm:$0xf]
        %v279 = vld [vmem:[%s238 + $0x78] sm:$0xf]
        %v280 = vld [vmem:[%s238 + $0x7c] sm:$0xf]
        %v281 = vld [vmem:[%s238 + $0x80] sm:$0xf]
        %v282 = vld [vmem:[%s238 + $0x84] sm:$0xf]
        %v283 = vld [vmem:[%s238 + $0x88] sm:$0xf]
        %v284 = vld [vmem:[%s238 + $0x8c] sm:$0xf]
        %v285 = vld [vmem:[%s238 + $0x90] sm:$0xf]
        %v286 = vld [vmem:[%s238 + $0x94] sm:$0xf]
        %v287 = vld [vmem:[%s238 + $0x98] sm:$0xf]
        %v288 = vld [vmem:[%s238 + $0x9c] sm:$0xf]
        %v289 = vld [vmem:[%s238 + $0xa0] sm:$0xf]
        %v290 = vld [vmem:[%s238 + $0xa4] sm:$0xf]
        %v291 = vld [vmem:[%s238 + $0xa8] sm:$0xf]
        %v292 = vld [vmem:[%s238 + $0xac] sm:$0xf]
        %v293 = vld [vmem:[%s238 + $0xb0] sm:$0xf]
        %v294 = vld [vmem:[%s238 + $0xb4] sm:$0xf]
        %v295 = vld [vmem:[%s238 + $0xb8] sm:$0xf]
        %v296 = vld [vmem:[%s238 + $0xbc] sm:$0xf]
        %v297 = vld [vmem:[%s238 + $0xc0] sm:$0xf]
        %v298 = vld [vmem:[%s238 + $0xc4] sm:$0xf]
        %v299 = vld [vmem:[%s238 + $0xc8] sm:$0xf]
        %v300 = vld [vmem:[%s238 + $0xcc] sm:$0xf]
        %v301 = vld [vmem:[%s238 + $0xd0] sm:$0xf]
        %v302 = vld [vmem:[%s238 + $0xd4] sm:$0xf]
        %v303 = vld [vmem:[%s238 + $0xd8] sm:$0xf]
        %v304 = vld [vmem:[%s238 + $0xdc] sm:$0xf]
        %v305 = vld [vmem:[%s238 + $0xe0] sm:$0xf]
        %v306 = vld [vmem:[%s238 + $0xe4] sm:$0xf]
        %v307 = vld [vmem:[%s238 + $0xe8] sm:$0xf]
        %v308 = vld [vmem:[%s238 + $0xec] sm:$0xf]
        %v309 = vld [vmem:[%s238 + $0xf0] sm:$0xf]
        %v310 = vld [vmem:[%s238 + $0xf4] sm:$0xf]
        %v311 = vld [vmem:[%s238 + $0xf8] sm:$0xf]
        %v312 = vld [vmem:[%s238 + $0xfc] sm:$0xf]
        %v315 = vunpack.c.l.s4 1966171168
        %v316 = vunpack.c.0.s8 %v315
        %v317 = vlaneseq
        %v318 = vshrl.u32 %v317, 7
        %v319 = vsub.s32 %v316, %v318
        %v320 = vrot.slane %v248, %v319
        %v321 = vcombine.high %v320, %v320
        %v323 = vunpack.c.l.s4 1966171168
        %v324 = vunpack.c.0.s8 %v323
        %v325 = vlaneseq
        %v326 = vshrl.u32 %v325, 7
        %v327 = vsub.s32 %v324, %v326
        %v328 = vrot.slane %v320, %v327
        %v330 = vunpack.c.l.s4 1966171168
        %v331 = vunpack.c.0.s8 %v330
        %v332 = vlaneseq
        %v333 = vshrl.u32 %v332, 7
        %v334 = vsub.s32 %v331, %v333
        %v335 = vrot.slane %v321, %v334
        %v336 = vcombine.high %v328, %v328
        %v337 = vcombine.high %v335, %v335
        %v406 = vunpack.c.l.b16 %v249
        %v407 = vunpack.c.l.b16 %v250
        %v408 = vunpack.c.l.b16 %v251
        %v409 = vunpack.c.l.b16 %v252
        %v410 = vunpack.c.l.b16 %v253
        %v411 = vunpack.c.l.b16 %v254
        %v412 = vunpack.c.l.b16 %v255
        %v413 = vunpack.c.l.b16 %v256
        %v414 = vunpack.c.l.b16 %v257
        %v415 = vunpack.c.l.b16 %v258
        %v416 = vunpack.c.l.b16 %v259
        %v417 = vunpack.c.l.b16 %v260
        %v418 = vunpack.c.l.b16 %v261
        %v419 = vunpack.c.l.b16 %v262
        %v420 = vunpack.c.l.b16 %v263
        %v421 = vunpack.c.l.b16 %v264
        %v422 = vunpack.c.l.b16 %v265
        %v423 = vunpack.c.l.b16 %v266
        %v424 = vunpack.c.l.b16 %v267
        %v425 = vunpack.c.l.b16 %v268
        %v426 = vunpack.c.l.b16 %v269
        %v427 = vunpack.c.l.b16 %v270
        %v428 = vunpack.c.l.b16 %v271
        %v429 = vunpack.c.l.b16 %v272
        %v430 = vunpack.c.l.b16 %v273
        %v431 = vunpack.c.l.b16 %v274
        %v432 = vunpack.c.l.b16 %v275
        %v433 = vunpack.c.l.b16 %v276
        %v434 = vunpack.c.l.b16 %v277
        %v435 = vunpack.c.l.b16 %v278
        %v436 = vunpack.c.l.b16 %v279
        %v437 = vunpack.c.l.b16 %v280
        %v438 = vunpack.c.l.b16 %v281
        %v439 = vunpack.c.l.b16 %v282
        %v440 = vunpack.c.l.b16 %v283
        %v441 = vunpack.c.l.b16 %v284
        %v442 = vunpack.c.l.b16 %v285
        %v443 = vunpack.c.l.b16 %v286
        %v444 = vunpack.c.l.b16 %v287
        %v445 = vunpack.c.l.b16 %v288
        %v446 = vunpack.c.l.b16 %v289
        %v447 = vunpack.c.l.b16 %v290
        %v448 = vunpack.c.l.b16 %v291
        %v449 = vunpack.c.l.b16 %v292
        %v450 = vunpack.c.l.b16 %v293
        %v451 = vunpack.c.l.b16 %v294
        %v452 = vunpack.c.l.b16 %v295
        %v453 = vunpack.c.l.b16 %v296
        %v454 = vunpack.c.l.b16 %v297
        %v455 = vunpack.c.l.b16 %v298
        %v456 = vunpack.c.l.b16 %v299
        %v457 = vunpack.c.l.b16 %v300
        %v458 = vunpack.c.l.b16 %v301
        %v459 = vunpack.c.l.b16 %v302
        %v460 = vunpack.c.l.b16 %v303
        %v461 = vunpack.c.l.b16 %v304
        %v462 = vunpack.c.l.b16 %v305
        %v463 = vunpack.c.l.b16 %v306
        %v464 = vunpack.c.l.b16 %v307
        %v465 = vunpack.c.l.b16 %v308
        %v466 = vunpack.c.l.b16 %v309
        %v467 = vunpack.c.l.b16 %v310
        %v468 = vunpack.c.l.b16 %v311
        %v469 = vunpack.c.l.b16 %v312
        %v470 = vpack.c.b16 %v407, %v406
        %v471 = vpack.c.b16 %v409, %v408
        %v472 = vpack.c.b16 %v411, %v410
        %v473 = vpack.c.b16 %v413, %v412
        %v474 = vpack.c.b16 %v415, %v414
        %v475 = vpack.c.b16 %v417, %v416
        %v476 = vpack.c.b16 %v419, %v418
        %v477 = vpack.c.b16 %v421, %v420
        %v478 = vpack.c.b16 %v423, %v422
        %v479 = vpack.c.b16 %v425, %v424
        %v480 = vpack.c.b16 %v427, %v426
        %v481 = vpack.c.b16 %v429, %v428
        %v482 = vpack.c.b16 %v431, %v430
        %v483 = vpack.c.b16 %v433, %v432
        %v484 = vpack.c.b16 %v435, %v434
        %v485 = vpack.c.b16 %v437, %v436
        %v486 = vpack.c.b16 %v439, %v438
        %v487 = vpack.c.b16 %v441, %v440
        %v488 = vpack.c.b16 %v443, %v442
        %v489 = vpack.c.b16 %v445, %v444
        %v490 = vpack.c.b16 %v447, %v446
        %v491 = vpack.c.b16 %v449, %v448
        %v492 = vpack.c.b16 %v451, %v450
        %v493 = vpack.c.b16 %v453, %v452
        %v494 = vpack.c.b16 %v455, %v454
        %v495 = vpack.c.b16 %v457, %v456
        %v496 = vpack.c.b16 %v459, %v458
        %v497 = vpack.c.b16 %v461, %v460
        %v498 = vpack.c.b16 %v463, %v462
        %v499 = vpack.c.b16 %v465, %v464
        %v500 = vpack.c.b16 %v467, %v466
        %v501 = vpack.c.b16 %v469, %v468
        %534 = vmatprep.subr.bf16.mxu0 0
        %535 = vmatpush1.bf16.msra.mxu0 %v477
        %536 = vmatprep.subr.bf16.mxu0 0
        %537 = vmatpush1.bf16.msra.mxu0 %v476
        %538 = vmatprep.subr.bf16.mxu0 0
        %539 = vmatpush1.bf16.msra.mxu0 %v475
        %540 = vmatprep.subr.bf16.mxu0 0
        %541 = vmatpush1.bf16.msra.mxu0 %v474
        %542 = vmatprep.subr.bf16.mxu0 0
        %543 = vmatpush1.bf16.msra.mxu0 %v473
        %544 = vmatprep.subr.bf16.mxu0 0
        %545 = vmatpush1.bf16.msra.mxu0 %v472
        %546 = vmatprep.subr.bf16.mxu0 0
        %547 = vmatpush1.bf16.msra.mxu0 %v471
        %548 = vmatprep.subr.bf16.mxu0 0
        %549 = vmatpush1.bf16.msra.mxu0 %v470
        %550 = vmatprep.subr.bf16.mxu0 0
        %551 = vmatpush2.bf16.msra.mxu0 %v485
        %552 = vmatprep.subr.bf16.mxu0 0
        %553 = vmatpush2.bf16.msra.mxu0 %v484
        %554 = vmatprep.subr.bf16.mxu0 0
        %555 = vmatpush2.bf16.msra.mxu0 %v483
        %556 = vmatprep.subr.bf16.mxu0 0
        %557 = vmatpush2.bf16.msra.mxu0 %v482
        %558 = vmatprep.subr.bf16.mxu0 0
        %559 = vmatpush2.bf16.msra.mxu0 %v481
        %560 = vmatprep.subr.bf16.mxu0 0
        %561 = vmatpush2.bf16.msra.mxu0 %v480
        %562 = vmatprep.subr.bf16.mxu0 0
        %563 = vmatpush2.bf16.msra.mxu0 %v479
        %564 = vmatprep.subr.bf16.mxu0 0
        %565 = vmatpush2.bf16.msra.mxu0 %v478
        %566 = vmatprep.mubr.bf16.mxu0 %v335
        %567 = vmatmul.mubr.bf16.gmra.mxu0 %v328
        %v568 = vpop.f32.mrf.mxu0
        %v569 = vadd.f32 0.0, %v568
        %v570 = vpop.f32.mrf.mxu0
        %v571 = vpop.f32.mrf.mxu0
        %v572 = vpop.f32.mrf.mxu0
        %573 = vdwg.mxu0
        %574 = vmatprep.subr.bf16.mxu0 0
        %575 = vmatpush1.bf16.msra.mxu0 %v493
        %576 = vmatprep.subr.bf16.mxu0 0
        %577 = vmatpush1.bf16.msra.mxu0 %v492
        %578 = vmatprep.subr.bf16.mxu0 0
        %579 = vmatpush1.bf16.msra.mxu0 %v491
        %580 = vmatprep.subr.bf16.mxu0 0
        %581 = vmatpush1.bf16.msra.mxu0 %v490
        %582 = vmatprep.subr.bf16.mxu0 0
        %583 = vmatpush1.bf16.msra.mxu0 %v489
        %584 = vmatprep.subr.bf16.mxu0 0
        %585 = vmatpush1.bf16.msra.mxu0 %v488
        %586 = vmatprep.subr.bf16.mxu0 0
        %587 = vmatpush1.bf16.msra.mxu0 %v487
        %588 = vmatprep.subr.bf16.mxu0 0
        %589 = vmatpush1.bf16.msra.mxu0 %v486
        %590 = vmatprep.subr.bf16.mxu0 0
        %591 = vmatpush2.bf16.msra.mxu0 %v501
        %592 = vmatprep.subr.bf16.mxu0 0
        %593 = vmatpush2.bf16.msra.mxu0 %v500
        %594 = vmatprep.subr.bf16.mxu0 0
        %595 = vmatpush2.bf16.msra.mxu0 %v499
        %596 = vmatprep.subr.bf16.mxu0 0
        %597 = vmatpush2.bf16.msra.mxu0 %v498
        %598 = vmatprep.subr.bf16.mxu0 0
        %599 = vmatpush2.bf16.msra.mxu0 %v497
        %600 = vmatprep.subr.bf16.mxu0 0
        %601 = vmatpush2.bf16.msra.mxu0 %v496
        %602 = vmatprep.subr.bf16.mxu0 0
        %603 = vmatpush2.bf16.msra.mxu0 %v495
        %604 = vmatprep.subr.bf16.mxu0 0
        %605 = vmatpush2.bf16.msra.mxu0 %v494
        %606 = vmatprep.mubr.bf16.mxu0 %v337
        %607 = vmatmul.mubr.bf16.gmra.mxu0 %v336
        %v608 = vpop.f32.mrf.mxu0
        %v609 = vadd.f32 %v569, %v608
        %v610 = vpop.f32.mrf.mxu0
        %v611 = vpop.f32.mrf.mxu0
        %v612 = vpop.f32.mrf.mxu0
        %613 = vdwg.mxu0
        %v614 = vadd.f32 %v247, %v609
        %vm615 = vcmask 58368
        %616 = vst.msk [vmem:[#allocation2] sm:$0x3] %vm615, %v614
        %p617 = scmp.eq.s32.totalorder %s23, 1
        // Predicated region
        $region37: #{tpu_custom_call.1} parent=31 // pred_check
          %p618 = pneg %p617
        $region38: #{tpu_custom_call.1} parent=31 // pred_check_branch
          %620 = sbr.rel (%p618) target = $region40
        $region39: #{tpu_custom_call.1} parent=31 // pred_region
          %v621 = vld [vmem:[#allocation2] sm:$0x3]
          %v622 = vld [vmem:[%s2] sm:$0x1]
          %v624 = vlaneseq
          %v625 = vshrl.u32 %v624, 7
          %v626 = vsub.s32 0, %v625
          %v627 = vrot.slane %v622, %v626
          %v629 = vadd.f32 %v621, %v627
          %vm630 = vcmask 25600
          %631 = vst.msk [vmem:[#allocation3] sm:$0x3] %vm630, %v629
          %v632 = vmul.f32 %v629, 1.442695
          %v633 = vpow.pop %v632
          %v634 = vmax.f32 %v633, 1e-06
          %636 = vrot.lane.b32.xlu0 %v634, 124
          %v637 = vpop.permute.xlu0 %636
          %639 = vst.msk [vmem:[#allocation5] sm:$0x3] %vm630, %v637
        $region40: #{tpu_custom_call.1} parent=31 // pred_fallthru
          _
        // Predicated region
        $region41: #{tpu_custom_call.1} parent=31 // pred_check
          %p640 = pneg %p123
        $region42: #{tpu_custom_call.1} parent=31 // pred_check_branch
          %642 = sbr.rel (%p640) target = $region44
        $region43: #{tpu_custom_call.1} parent=31 // pred_region
          %s644 = ssub.s32 32, 32
          %645 = vsyncadd [#allocation4], %s644
          %s646 = smul.addr %s22, 32
          %s647 = scalar_lea.hbm %s3, %s646
          %s649 = sshll.u32 [#allocation3], 4
          %s650 = int_to_ptr.vmem [resolvable:$true] %s649
          %652 = dma.vmem_to_hbm [thread:$0]  %s650, 32, %s647, [#allocation4]
        $region44: #{tpu_custom_call.1} parent=31 // pred_fallthru
          _
        // Predicated region
        $region45: #{tpu_custom_call.1} parent=31 // pred_check
          %p653 = pneg %p149
        $region46: #{tpu_custom_call.1} parent=31 // pred_check_branch
          %655 = sbr.rel (%p653) target = $region48
        $region47: #{tpu_custom_call.1} parent=31 // pred_region
          %s657 = ssub.s32 32, 32
          %658 = vsyncadd [#allocation6], %s657
          %s659 = smul.addr %s22, 32
          %s660 = scalar_lea.hbm %s4, %s659
          %s662 = sshll.u32 [#allocation5], 4
          %s663 = int_to_ptr.vmem [resolvable:$true] %s662
          %665 = dma.vmem_to_hbm [thread:$0]  %s663, 32, %s660, [#allocation6]
        $region48: #{tpu_custom_call.1} parent=31 // pred_fallthru
          _
        // Predicated region
        $region49: #{tpu_custom_call.1} parent=31 // pred_check
          %p666 = pneg %p123
        $region50: #{tpu_custom_call.1} parent=31 // pred_check_branch
          %668 = sbr.rel (%p666) target = $region52
        $region51: #{tpu_custom_call.1} parent=31 // pred_region
          %669 = dma.done [#allocation4], 32
        $region52: #{tpu_custom_call.1} parent=31 // pred_fallthru
          _
        // Predicated region
        $region53: #{tpu_custom_call.1} parent=31 // pred_check
          %p670 = pneg %p149
        $region54: #{tpu_custom_call.1} parent=31 // pred_check_branch
          %672 = sbr.rel (%p670) target = $region56
        $region55: #{tpu_custom_call.1} parent=31 // pred_region
          %673 = dma.done [#allocation6], 32
        $region56: #{tpu_custom_call.1} parent=31 // pred_fallthru
          _
      $region32: #{tpu_custom_call.1} parent=5 // pred_fallthru
        _
      %p674 = scmp.le.s32.totalorder 2, %s13
      // Predicated region
      $region57: #{tpu_custom_call.1} parent=5 // pred_check
        %p675 = pneg %p674
      $region58: #{tpu_custom_call.1} parent=5 // pred_check_branch
        %677 = sbr.rel (%p675) target = $region60
      $region59: #{tpu_custom_call.1} parent=5 // pred_region
        %s678 = ssub.s32 %s13, 2
      $region60: #{tpu_custom_call.1} parent=5 // pred_fallthru
        _
    $region6: #{tpu_custom_call.1} parent=1 // loop_footer
      %s17 = sadd.s32 1, %s13
    $region7: #{tpu_custom_call.1} parent=1 // loop_footer_branch
      %12 = sbr.rel target = $region3
    $region8: #{tpu_custom_call.1} parent=1 // loop_exit
      _
    %679 = vsyncpa [#allocation4], 1
    %s680 = scalar_lea.sflag [#allocation4], 1
    %681 = vsyncpa %s680, 1
    %682 = vsyncpa [#allocation6], 1

</llo_original>
